<compile_context>
chip_gen: v7x
topology: tpu7x:2x2x1
jax: 0.10.0
libtpu: 0.0.40
codegen_flags: <defaults>
</compile_context>

<pallas_src>
import functools

import jax
import jax.numpy as jnp
from jax.experimental import pallas as pl
from jax.experimental.pallas import tpu as pltpu

GAMMA = 1.5
ALPHA = 0.25
EPS = 1e-6

_LANES = 128
_SUBLANES = 8
_MAX_BLOCK_ROWS = 8192     # 8192 * 128 * 4 B = 4 MiB per f32 input per buffer
_NUM_PARTIALS = 2          # leading "parallel" axis -> per-core partial sums


def _cdiv(a, b):
    return -(-a // b)


def _pow_gamma(x, gamma):
    # Static specialization of x ** gamma (EUP-friendly for the module default).
    if gamma == 1.5:
        return x * jnp.sqrt(x)          # 1 EUP sqrt + 1 VPU mul
    if gamma == 2.0:
        return x * x
    if gamma == 1.0:
        return x
    if gamma == 0.0:
        return jnp.ones_like(x)
    return jnp.power(x, gamma)          # generic fallback (exp + log on EUP)


def _focal_loss_kernel(pt_ref, tgt_ref, out_ref, *, gamma, alpha, eps,
                       blocks_per_partial, last_blk, tail_rem,
                       binary_targets, needs_gate):
    p = pl.program_id(0)
    j = pl.program_id(1)

    # out_ref is the resident (8,128) partial-sum accumulator for partition p.
    @pl.when(j == 0)
    def _():
        out_ref[...] = jnp.zeros_like(out_ref)

    def tile_loss():
        # Clip FIRST — this is what makes overhanging / padded lanes safe
        # (finite logs, then masked out with a select). Do not reorder.
        pt = jnp.clip(pt_ref[...].astype(jnp.float32), eps, 1.0 - eps)
        t = tgt_ref[...].astype(jnp.float32)
        if binary_targets:
            # t in {0,1}: single-term form, 1 log + 1 sqrt per element.
            pos = t >= 0.5
            p_t = jnp.where(pos, pt, 1.0 - pt)
            one_m = 1.0 - p_t
            if alpha:
                coef = jnp.where(pos, jnp.float32(-alpha),
                                 jnp.float32(alpha - 1.0))
            else:
                coef = jnp.float32(-1.0)
            return coef * (_pow_gamma(one_m, gamma) * jnp.log(p_t))
        # Soft-label-safe two-term form (matches the PyTorch module exactly).
        one_m = 1.0 - pt
        term = (_pow_gamma(one_m, gamma) * t * jnp.log(pt)
                + _pow_gamma(pt, gamma) * (1.0 - t) * jnp.log(one_m))
        if alpha:
            # -(alpha*t + (1-alpha)*(1-t)) rewritten as one FMA-form expr.
            neg_alpha_t = (alpha - 1.0) + (1.0 - 2.0 * alpha) * t
            return neg_alpha_t * term
        return -term

    def fold(tile):
        # Fold (block_rows,128) -> (8,128) with pure vector adds; for large
        # blocks use a two-stage fold so the 4 VALUs get independent chains.
        r = tile.shape[0]
        if r % (4 * _SUBLANES) == 0 and r >= 4 * _SUBLANES:
            g = tile.reshape(-1, 4, _SUBLANES, _LANES)
            return g.sum(axis=0).sum(axis=0)
        return tile.reshape(-1, _SUBLANES, _LANES).sum(axis=0)

    if not needs_gate:
        # Fully aligned: every block is entirely valid — no mask, no gating.
        out_ref[...] += fold(tile_loss())
        return

    blk = p * blocks_per_partial + j
    block_elems = pt_ref.shape[0] * pt_ref.shape[1]

    @pl.when(blk < last_blk)
    def _():
        out_ref[...] += fold(tile_loss())

    @pl.when(blk == last_blk)
    def _():
        loss = tile_loss()
        if tail_rem < block_elems:   # static: mask only if the tail is partial
            r, c = loss.shape
            local = (jax.lax.broadcasted_iota(jnp.int32, (r, c), 0) * c
                     + jax.lax.broadcasted_iota(jnp.int32, (r, c), 1))
            # tail_rem is a trace-time Python int (no int32 overflow possible).
            loss = jnp.where(local < tail_rem, loss, 0.0)
        out_ref[...] += fold(loss)

    # blk > last_blk (trailing empty grid blocks from the partition rounding):
    # skipped entirely; the accumulator keeps its j==0 zeros.


def focal_loss(pt, target, gamma=GAMMA, alpha=ALPHA, reduction="sum",
               binary_targets=False, max_block_rows=_MAX_BLOCK_ROWS,
               num_partials=_NUM_PARTIALS):
    assert pt.shape == target.shape
    assert isinstance(gamma, (int, float)), "gamma must be a static Python number"
    assert alpha is None or isinstance(alpha, (int, float)), \
        "alpha must be a static Python number (traced alpha would mis-branch)"
    n = pt.size
    assert n > 0

    # Flatten; keep the caller's dtypes (kernel casts to f32 internally).
    pt_flat = jnp.ravel(pt)
    tgt_flat = jnp.ravel(target)

    # Pad only to the next lane multiple (<=127 elems) so the (rows,128)
    # reshape is legal; everything beyond is handled by block overhang + mask.
    lane_pad = (-n) % _LANES
    if lane_pad:
        pt_flat = jnp.pad(pt_flat, (0, lane_pad))
        tgt_flat = jnp.pad(tgt_flat, (0, lane_pad))
    rows = (n + lane_pad) // _LANES

    pt2 = pt_flat.reshape(rows, _LANES)
    tgt2 = tgt_flat.reshape(rows, _LANES)

    block_rows = min(max_block_rows, _cdiv(rows, _SUBLANES) * _SUBLANES)
    block_elems = block_rows * _LANES
    blocks_total = _cdiv(rows, block_rows)
    num_partials = max(1, min(num_partials, blocks_total))
    blocks_per_partial = _cdiv(blocks_total, num_partials)
    grid_blocks = num_partials * blocks_per_partial     # >= blocks_total

    last_blk = blocks_total - 1
    tail_rem = n - last_blk * block_elems                # valid elems in last block
    needs_gate = (grid_blocks > blocks_total) or (tail_rem < block_elems)

    if grid_blocks > blocks_total:
        # Clamp trailing empty blocks onto the last valid block so their DMA
        # stays in-bounds; the kernel body skips them via pl.when.
        def in_index(p, j):
            return (jnp.minimum(p * blocks_per_partial + j, last_blk), 0)
    else:
        def in_index(p, j):
            return (p * blocks_per_partial + j, 0)

    in_spec = pl.BlockSpec((block_rows, _LANES), in_index)
    out_spec = pl.BlockSpec((_SUBLANES, _LANES), lambda p, j: (p, 0))

    kernel = functools.partial(
        _focal_loss_kernel, gamma=gamma, alpha=alpha, eps=EPS,
        blocks_per_partial=blocks_per_partial, last_blk=last_blk,
        tail_rem=tail_rem, binary_targets=binary_targets, needs_gate=needs_gate)

    partials = pl.pallas_call(
        kernel,
        out_shape=jax.ShapeDtypeStruct((num_partials * _SUBLANES, _LANES),
                                       jnp.float32),
        grid_spec=pltpu.PrefetchScalarGridSpec(
            num_scalar_prefetch=0,
            grid=(num_partials, blocks_per_partial),
            in_specs=[in_spec, in_spec],
            out_specs=out_spec,
        ),
        compiler_params=pltpu.CompilerParams(
            dimension_semantics=("parallel", "arbitrary"),
            # 2 inputs x 2 pipeline buffers x 4 MiB (f32, 8192 rows) = 16 MiB:
            # within 32 MiB on every generation, including v7x's 64 MiB VMEM.
            vmem_limit_bytes=32 * 1024 * 1024,
        ),
    )(pt2, tgt2)

    loss_sum = jnp.sum(partials)
    if reduction == "sum":
        return loss_sum
    elif reduction == "mean":
        return loss_sum / n
    # TODO(synk): reduction='none' (returning the full per-element loss map) is
    # not lowered here; the module's configured modes are 'sum'/'mean'.
    raise NotImplementedError("reduction='none' not supported in this kernel")


def _focal_loss_ref(pt, target, gamma=GAMMA, alpha=ALPHA):
    pt = jnp.clip(pt.astype(jnp.float32), EPS, 1.0 - EPS)
    t = target.astype(jnp.float32)
    loss = (-(1.0 - pt) ** gamma * t * jnp.log(pt)
            - pt ** gamma * (1.0 - t) * jnp.log(1.0 - pt))
    alpha_t = alpha * t + (1.0 - alpha) * (1.0 - t)
    return jnp.sum(alpha_t * loss)


if __name__ == "__main__":
    key = jax.random.PRNGKey(0)
    ks = jax.random.split(key, 8)

    # Case 1: dense per-pixel probability map (NCHW), lane-aligned — no pad,
    # no mask, no gating (the pure fast path).
    shape = (2, 4, 16, 16)
    pt = jax.random.uniform(ks[0], shape, dtype=jnp.float32)
    target = (jax.random.uniform(ks[1], shape) > 0.5).astype(jnp.float32)
    out = jax.block_until_ready(focal_loss(pt, target))
    ref = _focal_loss_ref(pt, target)
    assert jnp.allclose(out, ref, rtol=1e-5, atol=1e-5), (out, ref)

    # Case 1b: opt-in binary-target path (1 log + 1 sqrt per element).
    out_b = jax.block_until_ready(focal_loss(pt, target, binary_targets=True))
    assert jnp.allclose(out_b, ref, rtol=1e-5, atol=1e-5), (out_b, ref)

    # Case 2: non-aligned shape — <=127-element lane pad, overhanging final
    # block, static tail mask behind pl.when.
    shape2 = (2, 3, 17, 19)
    pt2 = jax.random.uniform(ks[2], shape2, dtype=jnp.float32)
    target2 = (jax.random.uniform(ks[3], shape2) > 0.5).astype(jnp.float32)
    out2 = jax.block_until_ready(focal_loss(pt2, target2))
    ref2 = _focal_loss_ref(pt2, target2)
    assert jnp.allclose(out2, ref2, rtol=1e-5, atol=1e-5), (out2, ref2)

    # Case 3: soft labels, multi-block + 2-partition path (small block override
    # so the multi-block / overhang code is exercised at demo size).
    shape3 = (3, 5, 23, 29)
    pt3 = jax.random.uniform(ks[4], shape3, dtype=jnp.float32)
    target3 = jax.random.uniform(ks[5], shape3, dtype=jnp.float32)  # soft labels
    out3 = jax.block_until_ready(focal_loss(pt3, target3, max_block_rows=24))
    ref3 = _focal_loss_ref(pt3, target3)
    assert jnp.allclose(out3, ref3, rtol=1e-4, atol=1e-4), (out3, ref3)

    # Case 4: odd block count -> one trailing empty grid block on partition 1
    # (clamped index + skipped body), bf16 pt / int8 targets, binary path.
    n4 = 2900
    pt4 = jax.random.uniform(ks[6], (n4,), dtype=jnp.float32).astype(jnp.bfloat16)
    target4 = (jax.random.uniform(ks[7], (n4,)) > 0.5).astype(jnp.int8)
    out4 = jax.block_until_ready(
        focal_loss(pt4, target4, max_block_rows=8, binary_targets=True))
    ref4 = _focal_loss_ref(pt4.astype(jnp.float32), target4.astype(jnp.float32))
    assert jnp.allclose(out4, ref4, rtol=1e-4, atol=1e-4), (out4, ref4)

    print("KERNEL_OK")
</pallas_src>

<mosaic_0001>
module attributes {stable_mosaic.version = 11 : i64} {
  func.func @_focal_loss_kernel(%arg0: i32, %arg1: i32, %arg2: memref<16x128xf32, #tpu.memory_space<vmem>>, %arg3: memref<16x128xf32, #tpu.memory_space<vmem>>, %arg4: memref<8x128xf32, #tpu.memory_space<vmem>>) attributes {dimension_semantics = [#tpu.dimension_semantics<parallel>, #tpu.dimension_semantics<arbitrary>], iteration_bounds = array<i64: 1, 1>, scalar_prefetch = 0 : i64, scratch_operands = 0 : i64, tpu.core_type = #tpu.core_type<tc>, window_params = [{transform_indices = @transform_0, window_bounds = array<i64: 16, 128>}, {transform_indices = @transform_1, window_bounds = array<i64: 16, 128>}, {transform_indices = @transform_2, window_bounds = array<i64: 8, 128>}]} {
    %c0_i32 = arith.constant 0 : i32
    %0 = arith.cmpi eq, %arg1, %c0_i32 : i32
    %1 = arith.extui %0 : i1 to i32
    %c0_i32_0 = arith.constant 0 : i32
    %2 = arith.cmpi ne, %1, %c0_i32_0 : i32
    scf.if %2 {
      %cst_14 = arith.constant 0.000000e+00 : f32
      %34 = vector.broadcast %cst_14 : f32 to vector<8x128xf32>
      %c0_15 = arith.constant 0 : index
      %c0_16 = arith.constant 0 : index
      %35 = vector.load %arg4[%c0_15, %c0_16] : memref<8x128xf32, #tpu.memory_space<vmem>>, vector<8x128xf32>
      tpu.vector_store %arg4[%c0_15, %c0_16], %34 {strides = array<i32>} : memref<8x128xf32, #tpu.memory_space<vmem>>, vector<8x128xf32>,
    } else {
    }
    %c0 = arith.constant 0 : index
    %c0_1 = arith.constant 0 : index
    %3 = vector.load %arg4[%c0, %c0_1] : memref<8x128xf32, #tpu.memory_space<vmem>>, vector<8x128xf32>
    %c0_2 = arith.constant 0 : index
    %c0_3 = arith.constant 0 : index
    %4 = vector.load %arg2[%c0_2, %c0_3] : memref<16x128xf32, #tpu.memory_space<vmem>>, vector<16x128xf32>
    %cst = arith.constant 9.99999997E-7 : f32
    %cst_4 = arith.constant 0.999998986 : f32
    %5 = vector.broadcast %cst : f32 to vector<16x128xf32>
    %6 = arith.maximumf %5, %4 : vector<16x128xf32>
    %7 = vector.broadcast %cst_4 : f32 to vector<16x128xf32>
    %8 = arith.minimumf %7, %6 : vector<16x128xf32>
    %c0_5 = arith.constant 0 : index
    %c0_6 = arith.constant 0 : index
    %9 = vector.load %arg3[%c0_5, %c0_6] : memref<16x128xf32, #tpu.memory_space<vmem>>, vector<16x128xf32>
    %cst_7 = arith.constant 1.000000e+00 : f32
    %10 = vector.broadcast %cst_7 : f32 to vector<16x128xf32>
    %11 = arith.subf %10, %8 : vector<16x128xf32>
    %12 = math.sqrt %11 : vector<16x128xf32>
    %13 = arith.mulf %11, %12 : vector<16x128xf32>
    %14 = arith.mulf %13, %9 : vector<16x128xf32>
    %15 = math.log %8 : vector<16x128xf32>
    %16 = arith.mulf %14, %15 : vector<16x128xf32>
    %17 = math.sqrt %8 : vector<16x128xf32>
    %18 = arith.mulf %8, %17 : vector<16x128xf32>
    %cst_8 = arith.constant 1.000000e+00 : f32
    %19 = vector.broadcast %cst_8 : f32 to vector<16x128xf32>
    %20 = arith.subf %19, %9 : vector<16x128xf32>
    %21 = arith.mulf %18, %20 : vector<16x128xf32>
    %22 = math.log %11 : vector<16x128xf32>
    %23 = arith.mulf %21, %22 : vector<16x128xf32>
    %24 = arith.addf %16, %23 : vector<16x128xf32>
    %cst_9 = arith.constant 5.000000e-01 : f32
    %25 = vector.broadcast %cst_9 : f32 to vector<16x128xf32>
    %26 = arith.mulf %25, %9 : vector<16x128xf32>
    %cst_10 = arith.constant -7.500000e-01 : f32
    %27 = vector.broadcast %cst_10 : f32 to vector<16x128xf32>
    %28 = arith.addf %27, %26 : vector<16x128xf32>
    %29 = arith.mulf %28, %24 : vector<16x128xf32>
    %30 = vector.shape_cast %29 : vector<16x128xf32> to vector<2x8x128xf32>
    %cst_11 = arith.constant dense<0.000000e+00> : vector<8x128xf32>
    %31 = vector.multi_reduction <add>, %30, %cst_11 [0] : vector<2x8x128xf32> to vector<8x128xf32>
    %32 = arith.addf %3, %31 : vector<8x128xf32>
    %c0_12 = arith.constant 0 : index
    %c0_13 = arith.constant 0 : index
    %33 = vector.load %arg4[%c0_12, %c0_13] : memref<8x128xf32, #tpu.memory_space<vmem>>, vector<8x128xf32>
    tpu.vector_store %arg4[%c0_12, %c0_13], %32 {strides = array<i32>} : memref<8x128xf32, #tpu.memory_space<vmem>>, vector<8x128xf32>,
    return
  }
  func.func @transform_0(%arg0: i32, %arg1: i32) -> (i32, i32) {
    %c1_i32 = arith.constant 1 : i32
    %0 = arith.muli %arg0, %c1_i32 : i32
    %1 = arith.addi %0, %arg1 : i32
    %c0_i32 = arith.constant 0 : i32
    %c0_i32_0 = arith.constant 0 : i32
    return %1, %c0_i32 : i32, i32
  }
  func.func @transform_1(%arg0: i32, %arg1: i32) -> (i32, i32) {
    %c1_i32 = arith.constant 1 : i32
    %0 = arith.muli %arg0, %c1_i32 : i32
    %1 = arith.addi %0, %arg1 : i32
    %c0_i32 = arith.constant 0 : i32
    %c0_i32_0 = arith.constant 0 : i32
    return %1, %c0_i32 : i32, i32
  }
  func.func @transform_2(%arg0: i32, %arg1: i32) -> (i32, i32) {
    %c0_i32 = arith.constant 0 : i32
    %c0_i32_0 = arith.constant 0 : i32
    return %arg0, %c0_i32 : i32, i32
  }
}

</mosaic_0001>

<llo_original>
// kernel: tpu_custom_call.1
$region0: #{tpu_custom_call.1}
  #allocation0 [shape = 'u32[]', space=smem, size = 0x4, offset = 0x4, fixed_abs, tag = 'smem constant byte address 0x4 - core index']
  #allocation1 [shape = 'u32[144,128]{1,0:T(1,128)}', space=vmem, size = 0x12000, scoped, tag = 'internal scratch']
  %s0 = inlined_call_operand.hbm [shape: f32[16,128], index: 0, kind: input, shape index: {}]
  %s1 = inlined_call_operand.hbm [shape: f32[16,128], index: 1, kind: input, shape index: {}]
  %s2 = inlined_call_operand.hbm [shape: f32[8,128], index: 2, kind: output, shape index: {}]
  %s3 = sld [smem:[#allocation0]]
  $region30: #{tpu_custom_call.1} parent=0
    _
  %s5 = ssub.s32 1, %s3
  %s6 = scalar_select 0, %s5, %s3
  $region1: #{tpu_custom_call.1} parent=0
    #allocation2 [shape = 'u8[8192]{0}', space=vmem, size = 0x2000, scoped, tag = 'input window, operand 0, single buffered']
    #allocation3 [shape = 's32[1]{0}', space=sflag, size = 0x4, scoped, tag = 'scoped memory for tpu_custom_call.1']
    #allocation4 [shape = 's32[1]{0}', space=sflag, size = 0x4, scoped, tag = 'scoped memory for tpu_custom_call.1']
    #allocation5 [shape = 'u8[8192]{0}', space=vmem, size = 0x2000, scoped, tag = 'input window, operand 1, single buffered']
    #allocation6 [shape = 's32[1]{0}', space=sflag, size = 0x4, scoped, tag = 'scoped memory for tpu_custom_call.1']
    #allocation7 [shape = 'u8[4096]{0}', space=vmem, size = 0x1000, scoped, tag = 'output window, operand 0, single buffered']
    %7 = vsyncpa [#allocation3], 0
    %8 = vsyncpa [#allocation6], 0
    %9 = vsyncpa [#allocation4], 0
    // Predicated region
    $region2: #{tpu_custom_call.1} parent=1 // pred_check
      _
    $region3: #{tpu_custom_call.1} parent=1 // pred_check_branch
      %11 = sbr.rel (0) target = $region5
    $region4: #{tpu_custom_call.1} parent=1 // pred_region
      %s12 = sadd.s32 0, 0
      %s13 = smul.u32 2, %s12
      %s15 = ssub.s32 256, 256
      %16 = vsyncadd [#allocation3], %s15
      %s17 = smul.addr %s13, 128
      %s18 = scalar_lea.hbm %s0, %s17
      %s19 = sshll.u32 [#allocation2], 4
      %s20 = int_to_ptr.vmem [resolvable:$true] %s19
      %25 = dma.hbm_to_vmem [thread:$0]  %s18, 256, %s20, [#allocation3], 128, 128, 8
    $region5: #{tpu_custom_call.1} parent=1 // pred_fallthru
      _
    // Predicated region
    $region6: #{tpu_custom_call.1} parent=1 // pred_check
      _
    $region7: #{tpu_custom_call.1} parent=1 // pred_check_branch
      %27 = sbr.rel (0) target = $region9
    $region8: #{tpu_custom_call.1} parent=1 // pred_region
      %s28 = sadd.s32 0, 0
      %s29 = smul.u32 2, %s28
      %s31 = ssub.s32 256, 256
      %32 = vsyncadd [#allocation6], %s31
      %s33 = smul.addr %s29, 128
      %s34 = scalar_lea.hbm %s1, %s33
      %s35 = sshll.u32 [#allocation5], 4
      %s36 = int_to_ptr.vmem [resolvable:$true] %s35
      %41 = dma.hbm_to_vmem [thread:$0]  %s34, 256, %s36, [#allocation6], 128, 128, 8
    $region9: #{tpu_custom_call.1} parent=1 // pred_fallthru
      _
    // Predicated region
    $region10: #{tpu_custom_call.1} parent=1 // pred_check
      _
    $region11: #{tpu_custom_call.1} parent=1 // pred_check_branch
      %43 = sbr.rel (0) target = $region13
    $region12: #{tpu_custom_call.1} parent=1 // pred_region
      %44 = dma.done [#allocation3], 256
    $region13: #{tpu_custom_call.1} parent=1 // pred_fallthru
      _
    // Predicated region
    $region14: #{tpu_custom_call.1} parent=1 // pred_check
      _
    $region15: #{tpu_custom_call.1} parent=1 // pred_check_branch
      %46 = sbr.rel (0) target = $region17
    $region16: #{tpu_custom_call.1} parent=1 // pred_region
      %47 = dma.done [#allocation6], 256
    $region17: #{tpu_custom_call.1} parent=1 // pred_fallthru
      _
    %s48 = sadd.s32 0, 0
    %s49 = smul.u32 2, %s48
    %s50 = sadd.s32 0, 0
    %s51 = smul.u32 2, %s50
    %p52 = scmp.eq.s32.totalorder 0, 0
    // Predicated region
    $region18: #{tpu_custom_call.1} parent=1 // pred_check
      %p53 = pneg %p52
    $region19: #{tpu_custom_call.1} parent=1 // pred_check_branch
      %55 = sbr.rel (%p53) target = $region21
    $region20: #{tpu_custom_call.1} parent=1 // pred_region
      %56 = vst [vmem:[#allocation7] sm:$0xff] 0.0
    $region21: #{tpu_custom_call.1} parent=1 // pred_fallthru
      _
    %v57 = vld [vmem:[#allocation7] sm:$0xff]
    %v58 = vld [vmem:[#allocation2] sm:$0xff]
    %v59 = vld [vmem:[#allocation2 + $0x8] sm:$0xff]
    %v60 = vmax.f32 %v58, 1e-06
    %v61 = vmax.f32 %v59, 1e-06
    %v62 = vmin.f32 %v60, 0.999999
    %v63 = vmin.f32 %v61, 0.999999
    %v64 = vld [vmem:[#allocation5] sm:$0xff]
    %v65 = vld [vmem:[#allocation5 + $0x8] sm:$0xff]
    %v66 = vsub.f32 1.0, %v62
    %v67 = vsub.f32 1.0, %v63
    %v68 = vrsqrt.pop %v66
    %v69 = vmul.f32 %v66, %v68
    %vm70 = vcmp.eq.f32.partialorder %v66, inf
    %v71 = vsel %vm70, %v66, %v69
    %vm72 = vcmp.eq.f32.partialorder %v66, 0.0
    %v73 = vand.u32 %v66, 2147483648
    %v74 = vsel %vm72, %v73, %v71
    %v75 = vrsqrt.pop %v67
    %v76 = vmul.f32 %v67, %v75
    %vm77 = vcmp.eq.f32.partialorder %v67, inf
    %v78 = vsel %vm77, %v67, %v76
    %vm79 = vcmp.eq.f32.partialorder %v67, 0.0
    %v80 = vand.u32 %v67, 2147483648
    %v81 = vsel %vm79, %v80, %v78
    %v82 = vmul.f32 %v66, %v74
    %v83 = vmul.f32 %v67, %v81
    %v84 = vmul.f32 %v82, %v64
    %v85 = vmul.f32 %v83, %v65
    %v86 = vlog2.pop %v62
    %v87 = vmul.f32 %v86, 0.6931472
    %v88 = vlog2.pop %v63
    %v89 = vmul.f32 %v88, 0.6931472
    %v90 = vmul.f32 %v84, %v87
    %v91 = vmul.f32 %v85, %v89
    %v92 = vrsqrt.pop %v62
    %v93 = vmul.f32 %v62, %v92
    %vm94 = vcmp.eq.f32.partialorder %v62, inf
    %v95 = vsel %vm94, %v62, %v93
    %vm96 = vcmp.eq.f32.partialorder %v62, 0.0
    %v97 = vand.u32 %v62, 2147483648
    %v98 = vsel %vm96, %v97, %v95
    %v99 = vrsqrt.pop %v63
    %v100 = vmul.f32 %v63, %v99
    %vm101 = vcmp.eq.f32.partialorder %v63, inf
    %v102 = vsel %vm101, %v63, %v100
    %vm103 = vcmp.eq.f32.partialorder %v63, 0.0
    %v104 = vand.u32 %v63, 2147483648
    %v105 = vsel %vm103, %v104, %v102
    %v106 = vmul.f32 %v62, %v98
    %v107 = vmul.f32 %v63, %v105
    %v108 = vsub.f32 1.0, %v64
    %v109 = vsub.f32 1.0, %v65
    %v110 = vmul.f32 %v106, %v108
    %v111 = vmul.f32 %v107, %v109
    %v112 = vlog2.pop %v66
    %v113 = vmul.f32 %v112, 0.6931472
    %v114 = vlog2.pop %v67
    %v115 = vmul.f32 %v114, 0.6931472
    %v116 = vmul.f32 %v110, %v113
    %v117 = vmul.f32 %v111, %v115
    %v118 = vadd.f32 %v90, %v116
    %v119 = vadd.f32 %v91, %v117
    %v120 = vmul.f32 %v64, 0.5
    %v121 = vmul.f32 %v65, 0.5
    %v122 = vadd.f32 %v120, -0.75
    %v123 = vadd.f32 %v121, -0.75
    %v124 = vmul.f32 %v122, %v118
    %v125 = vmul.f32 %v123, %v119
    %v126 = vadd.f32 %v124, %v125
    %v127 = vadd.f32 %v57, %v126
    %128 = vst [vmem:[#allocation7] sm:$0xff] %v127
    // Predicated region
    $region22: #{tpu_custom_call.1} parent=1 // pred_check
      _
    $region23: #{tpu_custom_call.1} parent=1 // pred_check_branch
      %130 = sbr.rel (0) target = $region25
    $region24: #{tpu_custom_call.1} parent=1 // pred_region
      %s132 = ssub.s32 128, 128
      %133 = vsyncadd [#allocation4], %s132
      %s135 = sshll.u32 [#allocation7], 4
      %s136 = int_to_ptr.vmem [resolvable:$true] %s135
      %138 = dma.vmem_to_hbm [thread:$0]  %s136, 128, %s2, [#allocation4]
    $region25: #{tpu_custom_call.1} parent=1 // pred_fallthru
      _
    // Predicated region
    $region26: #{tpu_custom_call.1} parent=1 // pred_check
      _
    $region27: #{tpu_custom_call.1} parent=1 // pred_check_branch
      %140 = sbr.rel (0) target = $region29
    $region28: #{tpu_custom_call.1} parent=1 // pred_region
      %141 = dma.done [#allocation4], 128
    $region29: #{tpu_custom_call.1} parent=1 // pred_fallthru
      _
    %142 = vsyncpa [#allocation3], 1
    %143 = vsyncpa [#allocation6], 1
    %144 = vsyncpa [#allocation4], 1

</llo_original>
